<compile_context>
chip_gen: v7x
topology: tpu7x:2x2x1
jax: 0.10.0
libtpu: 0.0.40
codegen_flags: <defaults>
</compile_context>

<pallas_src>
import functools

import jax
import jax.numpy as jnp
from jax import lax
from jax.experimental import pallas as pl
from jax.experimental.pallas import tpu as pltpu

_LANES = 128
_ACC_ROWS = 64                      # (64,128) f32 accumulator = 32 KiB
_BLOCK_BYTES = 2 * 1024 * 1024      # ~2 MiB per input block (safe on v5e default VMEM)
_EPS = 1e-6


def _cdiv(a, b):
    return -(-a // b)


def _num_chunks_target():
    # v7x has 2 TensorCores per chip; v5e/v6e have 1, where an outer "parallel"
    # chunk axis only adds duplicate clamped-block work.
    try:
        kind = jax.devices()[0].device_kind.lower()
    except Exception:
        return 1
    return 2 if "7" in kind else 1


def _pick_block_rows(padded_rows, itemsize):
    budget_rows = _BLOCK_BYTES // (_LANES * itemsize)           # 4096 f32, 8192 bf16
    budget_rows = max(_ACC_ROWS, (budget_rows // _ACC_ROWS) * _ACC_ROWS)
    avail_rows = (padded_rows // _ACC_ROWS) * _ACC_ROWS         # multiple of 64, <= array
    return min(budget_rows, avail_rows)


def _mrae_kernel(o_ref, l_ref, out_ref, acc_ref, *,
                 rows, block_rows, steps, n_virtual_blocks):
    c = pl.program_id(0)   # outer (parallel) chunk
    s = pl.program_id(1)   # inner (sequential) reduction step

    folds = block_rows // _ACC_ROWS
    n_full_blocks = rows // block_rows            # blocks entirely made of real data
    has_full = n_full_blocks > 0
    has_tail = n_virtual_blocks > n_full_blocks   # boundary block and/or clamped dups

    @pl.when(s == 0)
    def _():
        acc_ref[...] = jnp.zeros_like(acc_ref)

    virt_block = c * steps + s

    def chunk_err(f):
        off = pl.multiple_of(f * _ACC_ROWS, _ACC_ROWS)
        o = o_ref[pl.ds(off, _ACC_ROWS), :].astype(jnp.float32)
        l = l_ref[pl.ds(off, _ACC_ROWS), :].astype(jnp.float32)
        return jnp.abs(o - l) / jnp.abs(l + jnp.float32(_EPS))

    def run_fast():
        # Fully-valid block: no mask, running sum carried in vregs (no per-fold
        # accumulator VMEM traffic).
        def body(f, acc):
            return acc + chunk_err(f)
        acc = lax.fori_loop(0, folds, body,
                            jnp.zeros((_ACC_ROWS, _LANES), jnp.float32),
                            unroll=min(8, folds))
        acc_ref[...] += acc

    def run_masked():
        # Boundary / clamped-duplicate block: row-level validity mask (no *128
        # multiply -> no int32 overflow for huge inputs). Runs on at most a
        # couple of blocks total, so cost is irrelevant.
        row_iota = lax.broadcasted_iota(jnp.int32, (_ACC_ROWS, _LANES), 0)
        base = virt_block * block_rows

        def body(f, acc):
            global_rows = row_iota + (base + f * _ACC_ROWS)
            valid = global_rows < rows
            return acc + jnp.where(valid, chunk_err(f), jnp.float32(0.0))

        acc = lax.fori_loop(0, folds, body,
                            jnp.zeros((_ACC_ROWS, _LANES), jnp.float32))
        acc_ref[...] += acc

    if has_full and has_tail:
        pl.when(virt_block < n_full_blocks)(run_fast)
        pl.when(virt_block >= n_full_blocks)(run_masked)
    elif has_full:
        run_fast()
    else:
        run_masked()

    @pl.when(s == steps - 1)
    def _():
        # Fold (64,128) accumulator to a lane-dense (8,128) partial: pure vreg adds.
        out_ref[0] = acc_ref[...].reshape(_ACC_ROWS // 8, 8, _LANES).sum(axis=0)


def loss_mrae(outputs, label):
    """Pallas TPU implementation of Loss_MRAE.forward."""
    assert outputs.shape == label.shape, "outputs and label must have the same shape"
    n_elems = int(outputs.size)

    o_flat = outputs.reshape(-1)
    l_flat = label.reshape(-1)

    # Prefix/tail split instead of padding the whole arrays: kernel handles the
    # 128-aligned prefix; the <128-element tail is summed in plain jnp.
    n_main = (n_elems // _LANES) * _LANES
    tail = n_elems - n_main

    total = jnp.float32(0.0)
    if tail:
        o_t = o_flat[n_main:].astype(jnp.float32)
        l_t = l_flat[n_main:].astype(jnp.float32)
        total = total + jnp.sum(jnp.abs(o_t - l_t) / jnp.abs(l_t + jnp.float32(_EPS)))

    if n_main:
        if n_main == n_elems:
            o_main, l_main = o_flat, l_flat            # common case: zero-copy
        else:
            o_main, l_main = o_flat[:n_main], l_flat[:n_main]

        rows = n_main // _LANES
        o2 = o_main.reshape(rows, _LANES)              # free contiguous reshape
        l2 = l_main.reshape(rows, _LANES)

        # Tiny inputs: pad up to one 64-row granule (<= 32 KiB copy); padded rows
        # are masked out in-kernel via the original `rows`.
        padded_rows = rows
        if rows < _ACC_ROWS:
            padded_rows = _ACC_ROWS
            o2 = jnp.pad(o2, ((0, padded_rows - rows), (0, 0)))
            l2 = jnp.pad(l2, ((0, padded_rows - rows), (0, 0)))

        itemsize = max(jnp.dtype(o2.dtype).itemsize, jnp.dtype(l2.dtype).itemsize)
        block_rows = _pick_block_rows(padded_rows, itemsize)
        total_blocks = _cdiv(padded_rows, block_rows)
        num_chunks = min(_num_chunks_target(), total_blocks)
        steps = _cdiv(total_blocks, num_chunks)

        def in_map(c, s):
            # Clamp so the virtual grid (num_chunks*steps >= total_blocks) never
            # issues a fully out-of-bounds DMA; duplicates are masked in-kernel.
            return (jnp.minimum(c * steps + s, total_blocks - 1), 0)

        kernel = functools.partial(
            _mrae_kernel,
            rows=rows, block_rows=block_rows, steps=steps,
            n_virtual_blocks=num_chunks * steps)

        bytes_accessed = int(o2.size * jnp.dtype(o2.dtype).itemsize
                             + l2.size * jnp.dtype(l2.dtype).itemsize
                             + num_chunks * 8 * _LANES * 4)

        partials = pl.pallas_call(
            kernel,
            out_shape=jax.ShapeDtypeStruct((num_chunks, 8, _LANES), jnp.float32),
            grid_spec=pltpu.PrefetchScalarGridSpec(
                num_scalar_prefetch=0,
                grid=(num_chunks, steps),
                in_specs=[
                    pl.BlockSpec((block_rows, _LANES), in_map),
                    pl.BlockSpec((block_rows, _LANES), in_map),
                ],
                out_specs=pl.BlockSpec((1, 8, _LANES), lambda c, s: (c, 0, 0)),
                scratch_shapes=[pltpu.VMEM((_ACC_ROWS, _LANES), jnp.float32)],
            ),
            compiler_params=pltpu.CompilerParams(
                dimension_semantics=("parallel", "arbitrary"),
            ),
            cost_estimate=pl.CostEstimate(
                flops=6 * n_main, transcendentals=0, bytes_accessed=bytes_accessed),
        )(o2, l2)

        total = total + jnp.sum(partials)

    return total / jnp.float32(n_elems)


if __name__ == "__main__":
    key = jax.random.PRNGKey(0)
    k1, k2 = jax.random.split(key)

    # Small NCHW-shaped example inputs consistent with an image-to-spectral model.
    shape = (2, 4, 16, 16)
    outputs = jax.random.normal(k1, shape, dtype=jnp.float32)
    # keep label away from 0 (as a real HSI label would be); semantics match regardless
    label = jax.random.normal(k2, shape, dtype=jnp.float32) + 2.0

    mrae = loss_mrae(outputs, label)
    mrae = jax.block_until_ready(mrae)

    # reference check in plain JAX
    ref = jnp.mean(jnp.abs(outputs - label) / jnp.abs(label + 1e-6))
    assert jnp.allclose(mrae, ref, rtol=1e-5, atol=1e-6), (mrae, ref)

    print("KERNEL_OK")
</pallas_src>

<mosaic_0001>
module attributes {stable_mosaic.version = 11 : i64} {
  func.func @_mrae_kernel(%arg0: i32, %arg1: i32, %arg2: memref<64x128xf32, #tpu.memory_space<vmem>>, %arg3: memref<64x128xf32, #tpu.memory_space<vmem>>, %arg4: memref<1x8x128xf32, #tpu.memory_space<vmem>>, %arg5: memref<64x128xf32, #tpu.memory_space<vmem>>) attributes {dimension_semantics = [#tpu.dimension_semantics<parallel>, #tpu.dimension_semantics<arbitrary>], iteration_bounds = array<i64: 1, 1>, scalar_prefetch = 0 : i64, scratch_operands = 1 : i64, tpu.core_type = #tpu.core_type<tc>, window_params = [{transform_indices = @transform_0, window_bounds = array<i64: 64, 128>}, {transform_indices = @transform_1, window_bounds = array<i64: 64, 128>}, {transform_indices = @transform_2, window_bounds = array<i64: 1, 8, 128>}]} {
    %c0_i32 = arith.constant 0 : i32
    %0 = arith.cmpi eq, %arg1, %c0_i32 : i32
    %1 = arith.extui %0 : i1 to i32
    %c0_i32_0 = arith.constant 0 : i32
    %2 = arith.cmpi ne, %1, %c0_i32_0 : i32
    scf.if %2 {
      %cst_14 = arith.constant 0.000000e+00 : f32
      %35 = vector.broadcast %cst_14 : f32 to vector<64x128xf32>
      %c0_15 = arith.constant 0 : index
      %c0_16 = arith.constant 0 : index
      %36 = vector.load %arg5[%c0_15, %c0_16] : memref<64x128xf32, #tpu.memory_space<vmem>>, vector<64x128xf32>
      tpu.vector_store %arg5[%c0_15, %c0_16], %35 {strides = array<i32>} : memref<64x128xf32, #tpu.memory_space<vmem>>, vector<64x128xf32>,
    } else {
    }
    %c1_i32 = arith.constant 1 : i32
    %3 = arith.muli %arg0, %c1_i32 : i32
    %4 = arith.addi %3, %arg1 : i32
    %5 = tpu.iota {dimensions = array<i32: 0>} : vector<64x128xi32>
    %c64_i32 = arith.constant 64 : i32
    %6 = arith.muli %4, %c64_i32 : i32
    %cst = arith.constant 0.000000e+00 : f32
    %7 = vector.broadcast %cst : f32 to vector<64x128xf32>
    %c0_i32_1 = arith.constant 0 : i32
    %c64_i32_2 = arith.constant 64 : i32
    %8 = arith.muli %c0_i32_1, %c64_i32_2 : i32
    %9 = arith.addi %6, %8 : i32
    %10 = vector.broadcast %9 : i32 to vector<64x128xi32>
    %11 = arith.addi %5, %10 : vector<64x128xi32>
    %c16_i32 = arith.constant 16 : i32
    %12 = vector.broadcast %c16_i32 : i32 to vector<64x128xi32>
    %13 = arith.cmpi slt, %11, %12 : vector<64x128xi32>
    %c64_i32_3 = arith.constant 64 : i32
    %14 = arith.muli %c0_i32_1, %c64_i32_3 : i32
    %15 = tpu.assume_multiple %14, 64 : i32
    %16 = arith.index_cast %15 : i32 to index
    %c0 = arith.constant 0 : index
    %17 = vector.load %arg2[%16, %c0] : memref<64x128xf32, #tpu.memory_space<vmem>>, vector<64x128xf32>
    %18 = arith.index_cast %15 : i32 to index
    %c0_4 = arith.constant 0 : index
    %19 = vector.load %arg3[%18, %c0_4] : memref<64x128xf32, #tpu.memory_space<vmem>>, vector<64x128xf32>
    %20 = arith.subf %17, %19 : vector<64x128xf32>
    %21 = math.absf %20 : vector<64x128xf32>
    %cst_5 = arith.constant 9.99999997E-7 : f32
    %22 = vector.broadcast %cst_5 : f32 to vector<64x128xf32>
    %23 = arith.addf %19, %22 : vector<64x128xf32>
    %24 = math.absf %23 : vector<64x128xf32>
    %25 = arith.divf %21, %24 : vector<64x128xf32>
    %cst_6 = arith.constant 0.000000e+00 : f32
    %26 = vector.broadcast %cst_6 : f32 to vector<64x128xf32>
    %27 = arith.select %13, %25, %26 : vector<64x128xi1>, vector<64x128xf32>
    %28 = arith.addf %7, %27 : vector<64x128xf32>
    %c1_i32_7 = arith.constant 1 : i32
    %c0_8 = arith.constant 0 : index
    %c0_9 = arith.constant 0 : index
    %29 = vector.load %arg5[%c0_8, %c0_9] : memref<64x128xf32, #tpu.memory_space<vmem>>, vector<64x128xf32>
    %30 = arith.addf %29, %28 : vector<64x128xf32>
    %c0_10 = arith.constant 0 : index
    %c0_11 = arith.constant 0 : index
    %31 = vector.load %arg5[%c0_10, %c0_11] : memref<64x128xf32, #tpu.memory_space<vmem>>, vector<64x128xf32>
    tpu.vector_store %arg5[%c0_10, %c0_11], %30 {strides = array<i32>} : memref<64x128xf32, #tpu.memory_space<vmem>>, vector<64x128xf32>,
    %c0_i32_12 = arith.constant 0 : i32
    %32 = arith.cmpi eq, %arg1, %c0_i32_12 : i32
    %33 = arith.extui %32 : i1 to i32
    %c0_i32_13 = arith.constant 0 : i32
    %34 = arith.cmpi ne, %33, %c0_i32_13 : i32
    scf.if %34 {
      %c0_14 = arith.constant 0 : index
      %c0_15 = arith.constant 0 : index
      %35 = vector.load %arg5[%c0_14, %c0_15] : memref<64x128xf32, #tpu.memory_space<vmem>>, vector<64x128xf32>
      %36 = vector.shape_cast %35 : vector<64x128xf32> to vector<8x8x128xf32>
      %cst_16 = arith.constant dense<0.000000e+00> : vector<8x128xf32>
      %37 = vector.multi_reduction <add>, %36, %cst_16 [0] : vector<8x8x128xf32> to vector<8x128xf32>
      %c0_17 = arith.constant 0 : index
      %c0_18 = arith.constant 0 : index
      %c0_19 = arith.constant 0 : index
      %38 = vector.load %arg4[%c0_17, %c0_18, %c0_19] : memref<1x8x128xf32, #tpu.memory_space<vmem>>, vector<1x8x128xf32>
      %39 = vector.shape_cast %38 : vector<1x8x128xf32> to vector<8x128xf32>
      %40 = vector.shape_cast %37 : vector<8x128xf32> to vector<1x8x128xf32>
      tpu.vector_store %arg4[%c0_17, %c0_18, %c0_19], %40 {strides = array<i32>} : memref<1x8x128xf32, #tpu.memory_space<vmem>>, vector<1x8x128xf32>,
    } else {
    }
    return
  }
  func.func @transform_0(%arg0: i32, %arg1: i32) -> (i32, i32) {
    %c1_i32 = arith.constant 1 : i32
    %0 = arith.muli %arg0, %c1_i32 : i32
    %1 = arith.addi %0, %arg1 : i32
    %c0_i32 = arith.constant 0 : i32
    %2 = arith.minsi %1, %c0_i32 : i32
    %c0_i32_0 = arith.constant 0 : i32
    %c0_i32_1 = arith.constant 0 : i32
    return %2, %c0_i32_0 : i32, i32
  }
  func.func @transform_1(%arg0: i32, %arg1: i32) -> (i32, i32) {
    %c1_i32 = arith.constant 1 : i32
    %0 = arith.muli %arg0, %c1_i32 : i32
    %1 = arith.addi %0, %arg1 : i32
    %c0_i32 = arith.constant 0 : i32
    %2 = arith.minsi %1, %c0_i32 : i32
    %c0_i32_0 = arith.constant 0 : i32
    %c0_i32_1 = arith.constant 0 : i32
    return %2, %c0_i32_0 : i32, i32
  }
  func.func @transform_2(%arg0: i32, %arg1: i32) -> (i32, i32, i32) {
    %c0_i32 = arith.constant 0 : i32
    %c0_i32_0 = arith.constant 0 : i32
    %c0_i32_1 = arith.constant 0 : i32
    return %arg0, %c0_i32, %c0_i32_0 : i32, i32, i32
  }
}

</mosaic_0001>

<llo_original>
// kernel: tpu_custom_call.1
$region0: #{tpu_custom_call.1}
  #allocation0 [shape = 'u32[]', space=smem, size = 0x4, offset = 0x4, fixed_abs, tag = 'smem constant byte address 0x4 - core index']
  #allocation1 [shape = 'u32[144,128]{1,0:T(1,128)}', space=vmem, size = 0x12000, scoped, tag = 'internal scratch']
  #allocation2 [shape = 'f32[64,128]{1,0:T(8,128)}', space=vmem, size = 0x8000, scoped, tag = 'scratch operand']
  %s0 = inlined_call_operand.hbm [shape: f32[64,128], index: 0, kind: input, shape index: {}]
  %s1 = inlined_call_operand.hbm [shape: f32[64,128], index: 1, kind: input, shape index: {}]
  %s2 = inlined_call_operand.hbm [shape: f32[1,8,128], index: 2, kind: output, shape index: {}]
  %s3 = sld [smem:[#allocation0]]
  $region34: #{tpu_custom_call.1} parent=0
    _
  %s5 = ssub.s32 1, %s3
  %s6 = scalar_select 0, %s5, %s3
  $region1: #{tpu_custom_call.1} parent=0
    #allocation3 [shape = 'u8[32768]{0}', space=vmem, size = 0x8000, scoped, tag = 'input window, operand 0, single buffered']
    #allocation4 [shape = 's32[1]{0}', space=sflag, size = 0x4, scoped, tag = 'scoped memory for tpu_custom_call.1']
    #allocation5 [shape = 's32[1]{0}', space=sflag, size = 0x4, scoped, tag = 'scoped memory for tpu_custom_call.1']
    #allocation6 [shape = 'u8[32768]{0}', space=vmem, size = 0x8000, scoped, tag = 'input window, operand 1, single buffered']
    #allocation7 [shape = 's32[1]{0}', space=sflag, size = 0x4, scoped, tag = 'scoped memory for tpu_custom_call.1']
    #allocation8 [shape = 'u8[4096]{0}', space=vmem, size = 0x1000, scoped, tag = 'output window, operand 0, single buffered']
    %7 = vsyncpa [#allocation4], 0
    %8 = vsyncpa [#allocation7], 0
    %9 = vsyncpa [#allocation5], 0
    // Predicated region
    $region2: #{tpu_custom_call.1} parent=1 // pred_check
      _
    $region3: #{tpu_custom_call.1} parent=1 // pred_check_branch
      %11 = sbr.rel (0) target = $region5
    $region4: #{tpu_custom_call.1} parent=1 // pred_region
      %s12 = sadd.s32 0, 0
      %p13 = scmp.lt.s32.totalorder %s12, 0
      %s14 = scalar_select %p13, %s12, 0
      %s15 = smul.u32 8, %s14
      %s17 = ssub.s32 1024, 1024
      %18 = vsyncadd [#allocation4], %s17
      %s19 = smul.addr %s15, 128
      %s20 = scalar_lea.hbm %s0, %s19
      %s21 = sshll.u32 [#allocation3], 4
      %s22 = int_to_ptr.vmem [resolvable:$true] %s21
      %27 = dma.hbm_to_vmem [thread:$0]  %s20, 1024, %s22, [#allocation4], 128, 128, 8
    $region5: #{tpu_custom_call.1} parent=1 // pred_fallthru
      _
    // Predicated region
    $region6: #{tpu_custom_call.1} parent=1 // pred_check
      _
    $region7: #{tpu_custom_call.1} parent=1 // pred_check_branch
      %29 = sbr.rel (0) target = $region9
    $region8: #{tpu_custom_call.1} parent=1 // pred_region
      %s30 = sadd.s32 0, 0
      %p31 = scmp.lt.s32.totalorder %s30, 0
      %s32 = scalar_select %p31, %s30, 0
      %s33 = smul.u32 8, %s32
      %s35 = ssub.s32 1024, 1024
      %36 = vsyncadd [#allocation7], %s35
      %s37 = smul.addr %s33, 128
      %s38 = scalar_lea.hbm %s1, %s37
      %s39 = sshll.u32 [#allocation6], 4
      %s40 = int_to_ptr.vmem [resolvable:$true] %s39
      %45 = dma.hbm_to_vmem [thread:$0]  %s38, 1024, %s40, [#allocation7], 128, 128, 8
    $region9: #{tpu_custom_call.1} parent=1 // pred_fallthru
      _
    // Predicated region
    $region10: #{tpu_custom_call.1} parent=1 // pred_check
      _
    $region11: #{tpu_custom_call.1} parent=1 // pred_check_branch
      %47 = sbr.rel (0) target = $region13
    $region12: #{tpu_custom_call.1} parent=1 // pred_region
      %48 = dma.done [#allocation4], 1024
    $region13: #{tpu_custom_call.1} parent=1 // pred_fallthru
      _
    // Predicated region
    $region14: #{tpu_custom_call.1} parent=1 // pred_check
      _
    $region15: #{tpu_custom_call.1} parent=1 // pred_check_branch
      %50 = sbr.rel (0) target = $region17
    $region16: #{tpu_custom_call.1} parent=1 // pred_region
      %51 = dma.done [#allocation7], 1024
    $region17: #{tpu_custom_call.1} parent=1 // pred_fallthru
      _
    %s52 = sadd.s32 0, 0
    %p53 = scmp.lt.s32.totalorder %s52, 0
    %s54 = scalar_select %p53, %s52, 0
    %s55 = smul.u32 8, %s54
    %s56 = sadd.s32 0, 0
    %p57 = scmp.lt.s32.totalorder %s56, 0
    %s58 = scalar_select %p57, %s56, 0
    %s59 = smul.u32 8, %s58
    %p60 = scmp.eq.s32.totalorder 0, 0
    // Predicated region
    $region18: #{tpu_custom_call.1} parent=1 // pred_check
      %p61 = pneg %p60
    $region19: #{tpu_custom_call.1} parent=1 // pred_check_branch
      %63 = sbr.rel (%p61) target = $region21
    $region20: #{tpu_custom_call.1} parent=1 // pred_region
      %64 = vst [vmem:[#allocation2] sm:$0xff] 0.0
      %65 = vst [vmem:[#allocation2 + $0x8] sm:$0xff] 0.0
      %66 = vst [vmem:[#allocation2 + $0x10] sm:$0xff] 0.0
      %67 = vst [vmem:[#allocation2 + $0x18] sm:$0xff] 0.0
      %68 = vst [vmem:[#allocation2 + $0x20] sm:$0xff] 0.0
      %69 = vst [vmem:[#allocation2 + $0x28] sm:$0xff] 0.0
      %70 = vst [vmem:[#allocation2 + $0x30] sm:$0xff] 0.0
      %71 = vst [vmem:[#allocation2 + $0x38] sm:$0xff] 0.0
    $region21: #{tpu_custom_call.1} parent=1 // pred_fallthru
      _
    %s72 = sadd.s32 0, 0
    %v73 = vlaneseq
    %v74 = vshrl.u32 %v73, 7
    %v75 = vadd.s32 %v74, 8
    %v76 = vadd.s32 %v74, 16
    %v77 = vadd.s32 %v74, 24
    %v78 = vadd.s32 %v74, 32
    %v79 = vadd.s32 %v74, 40
    %v80 = vadd.s32 %v74, 48
    %v81 = vadd.s32 %v74, 56
    %s82 = smul.u32 %s72, 64
    %v83 = vstv %s82
    %v84 = vadd.s32 %v74, %v83
    %v85 = vadd.s32 %v75, %v83
    %v86 = vadd.s32 %v76, %v83
    %v87 = vadd.s32 %v77, %v83
    %v88 = vadd.s32 %v78, %v83
    %v89 = vadd.s32 %v79, %v83
    %v90 = vadd.s32 %v80, %v83
    %v91 = vadd.s32 %v81, %v83
    %vm92 = vcmp.lt.s32.totalorder %v84, 16
    %vm93 = vcmp.lt.s32.totalorder %v85, 16
    %vm94 = vcmp.lt.s32.totalorder %v86, 16
    %vm95 = vcmp.lt.s32.totalorder %v87, 16
    %vm96 = vcmp.lt.s32.totalorder %v88, 16
    %vm97 = vcmp.lt.s32.totalorder %v89, 16
    %vm98 = vcmp.lt.s32.totalorder %v90, 16
    %vm99 = vcmp.lt.s32.totalorder %v91, 16
    %v100 = vld [vmem:[#allocation3] sm:$0xff]
    %v101 = vld [vmem:[#allocation3 + $0x8] sm:$0xff]
    %v102 = vld [vmem:[#allocation3 + $0x10] sm:$0xff]
    %v103 = vld [vmem:[#allocation3 + $0x18] sm:$0xff]
    %v104 = vld [vmem:[#allocation3 + $0x20] sm:$0xff]
    %v105 = vld [vmem:[#allocation3 + $0x28] sm:$0xff]
    %v106 = vld [vmem:[#allocation3 + $0x30] sm:$0xff]
    %v107 = vld [vmem:[#allocation3 + $0x38] sm:$0xff]
    %v108 = vld [vmem:[#allocation6] sm:$0xff]
    %v109 = vld [vmem:[#allocation6 + $0x8] sm:$0xff]
    %v110 = vld [vmem:[#allocation6 + $0x10] sm:$0xff]
    %v111 = vld [vmem:[#allocation6 + $0x18] sm:$0xff]
    %v112 = vld [vmem:[#allocation6 + $0x20] sm:$0xff]
    %v113 = vld [vmem:[#allocation6 + $0x28] sm:$0xff]
    %v114 = vld [vmem:[#allocation6 + $0x30] sm:$0xff]
    %v115 = vld [vmem:[#allocation6 + $0x38] sm:$0xff]
    %v116 = vsub.f32 %v100, %v108
    %v117 = vsub.f32 %v101, %v109
    %v118 = vsub.f32 %v102, %v110
    %v119 = vsub.f32 %v103, %v111
    %v120 = vsub.f32 %v104, %v112
    %v121 = vsub.f32 %v105, %v113
    %v122 = vsub.f32 %v106, %v114
    %v123 = vsub.f32 %v107, %v115
    %v124 = vand.u32 2147483647, %v116
    %v125 = vand.u32 2147483647, %v117
    %v126 = vand.u32 2147483647, %v118
    %v127 = vand.u32 2147483647, %v119
    %v128 = vand.u32 2147483647, %v120
    %v129 = vand.u32 2147483647, %v121
    %v130 = vand.u32 2147483647, %v122
    %v131 = vand.u32 2147483647, %v123
    %v132 = vadd.f32 %v108, 1e-06
    %v133 = vadd.f32 %v109, 1e-06
    %v134 = vadd.f32 %v110, 1e-06
    %v135 = vadd.f32 %v111, 1e-06
    %v136 = vadd.f32 %v112, 1e-06
    %v137 = vadd.f32 %v113, 1e-06
    %v138 = vadd.f32 %v114, 1e-06
    %v139 = vadd.f32 %v115, 1e-06
    %v140 = vand.u32 2147483647, %v132
    %v141 = vand.u32 2147483647, %v133
    %v142 = vand.u32 2147483647, %v134
    %v143 = vand.u32 2147483647, %v135
    %v144 = vand.u32 2147483647, %v136
    %v145 = vand.u32 2147483647, %v137
    %v146 = vand.u32 2147483647, %v138
    %v147 = vand.u32 2147483647, %v139
    %v148 = vrcp.pop %v140
    %v149 = vmul.f32 %v124, %v148
    %v150 = vrcp.pop %v141
    %v151 = vmul.f32 %v125, %v150
    %v152 = vrcp.pop %v142
    %v153 = vmul.f32 %v126, %v152
    %v154 = vrcp.pop %v143
    %v155 = vmul.f32 %v127, %v154
    %v156 = vrcp.pop %v144
    %v157 = vmul.f32 %v128, %v156
    %v158 = vrcp.pop %v145
    %v159 = vmul.f32 %v129, %v158
    %v160 = vrcp.pop %v146
    %v161 = vmul.f32 %v130, %v160
    %v162 = vrcp.pop %v147
    %v163 = vmul.f32 %v131, %v162
    %v164 = vsel %vm92, %v149, 0.0
    %v165 = vsel %vm93, %v151, 0.0
    %v166 = vsel %vm94, %v153, 0.0
    %v167 = vsel %vm95, %v155, 0.0
    %v168 = vsel %vm96, %v157, 0.0
    %v169 = vsel %vm97, %v159, 0.0
    %v170 = vsel %vm98, %v161, 0.0
    %v171 = vsel %vm99, %v163, 0.0
    %v172 = vadd.f32 %v164, 0.0
    %v173 = vadd.f32 %v165, 0.0
    %v174 = vadd.f32 %v166, 0.0
    %v175 = vadd.f32 %v167, 0.0
    %v176 = vadd.f32 %v168, 0.0
    %v177 = vadd.f32 %v169, 0.0
    %v178 = vadd.f32 %v170, 0.0
    %v179 = vadd.f32 %v171, 0.0
    %v180 = vld [vmem:[#allocation2] sm:$0xff]
    %v181 = vld [vmem:[#allocation2 + $0x8] sm:$0xff]
    %v182 = vld [vmem:[#allocation2 + $0x10] sm:$0xff]
    %v183 = vld [vmem:[#allocation2 + $0x18] sm:$0xff]
    %v184 = vld [vmem:[#allocation2 + $0x20] sm:$0xff]
    %v185 = vld [vmem:[#allocation2 + $0x28] sm:$0xff]
    %v186 = vld [vmem:[#allocation2 + $0x30] sm:$0xff]
    %v187 = vld [vmem:[#allocation2 + $0x38] sm:$0xff]
    %v188 = vadd.f32 %v180, %v172
    %v189 = vadd.f32 %v181, %v173
    %v190 = vadd.f32 %v182, %v174
    %v191 = vadd.f32 %v183, %v175
    %v192 = vadd.f32 %v184, %v176
    %v193 = vadd.f32 %v185, %v177
    %v194 = vadd.f32 %v186, %v178
    %v195 = vadd.f32 %v187, %v179
    %196 = vst [vmem:[#allocation2] sm:$0xff] %v188
    %197 = vst [vmem:[#allocation2 + $0x8] sm:$0xff] %v189
    %198 = vst [vmem:[#allocation2 + $0x10] sm:$0xff] %v190
    %199 = vst [vmem:[#allocation2 + $0x18] sm:$0xff] %v191
    %200 = vst [vmem:[#allocation2 + $0x20] sm:$0xff] %v192
    %201 = vst [vmem:[#allocation2 + $0x28] sm:$0xff] %v193
    %202 = vst [vmem:[#allocation2 + $0x30] sm:$0xff] %v194
    %203 = vst [vmem:[#allocation2 + $0x38] sm:$0xff] %v195
    // Predicated region
    $region22: #{tpu_custom_call.1} parent=1 // pred_check
      %p204 = pneg %p60
    $region23: #{tpu_custom_call.1} parent=1 // pred_check_branch
      %206 = sbr.rel (%p204) target = $region25
    $region24: #{tpu_custom_call.1} parent=1 // pred_region
      %v207 = vld [vmem:[#allocation2] sm:$0xff]
      %v208 = vld [vmem:[#allocation2 + $0x8] sm:$0xff]
      %v209 = vld [vmem:[#allocation2 + $0x10] sm:$0xff]
      %v210 = vld [vmem:[#allocation2 + $0x18] sm:$0xff]
      %v211 = vld [vmem:[#allocation2 + $0x20] sm:$0xff]
      %v212 = vld [vmem:[#allocation2 + $0x28] sm:$0xff]
      %v213 = vld [vmem:[#allocation2 + $0x30] sm:$0xff]
      %v214 = vld [vmem:[#allocation2 + $0x38] sm:$0xff]
      %v215 = vadd.f32 %v207, %v208
      %v216 = vadd.f32 %v215, %v209
      %v217 = vadd.f32 %v216, %v210
      %v218 = vadd.f32 %v217, %v211
      %v219 = vadd.f32 %v218, %v212
      %v220 = vadd.f32 %v219, %v213
      %v221 = vadd.f32 %v220, %v214
      %222 = vst [vmem:[#allocation8] sm:$0xff] %v221
    $region25: #{tpu_custom_call.1} parent=1 // pred_fallthru
      _
    // Predicated region
    $region26: #{tpu_custom_call.1} parent=1 // pred_check
      _
    $region27: #{tpu_custom_call.1} parent=1 // pred_check_branch
      %224 = sbr.rel (0) target = $region29
    $region28: #{tpu_custom_call.1} parent=1 // pred_region
      %s226 = ssub.s32 128, 128
      %227 = vsyncadd [#allocation5], %s226
      %s229 = sshll.u32 [#allocation8], 4
      %s230 = int_to_ptr.vmem [resolvable:$true] %s229
      %232 = dma.vmem_to_hbm [thread:$0]  %s230, 128, %s2, [#allocation5]
    $region29: #{tpu_custom_call.1} parent=1 // pred_fallthru
      _
    // Predicated region
    $region30: #{tpu_custom_call.1} parent=1 // pred_check
      _
    $region31: #{tpu_custom_call.1} parent=1 // pred_check_branch
      %234 = sbr.rel (0) target = $region33
    $region32: #{tpu_custom_call.1} parent=1 // pred_region
      %235 = dma.done [#allocation5], 128
    $region33: #{tpu_custom_call.1} parent=1 // pred_fallthru
      _
    %236 = vsyncpa [#allocation4], 1
    %237 = vsyncpa [#allocation7], 1
    %238 = vsyncpa [#allocation5], 1

</llo_original>
